<compile_context>
chip_gen: v7x
topology: tpu7x:2x2x1
jax: 0.10.0
libtpu: 0.0.40
codegen_flags: <defaults>
</compile_context>

<pallas_src>
import functools
import math

import jax
import jax.numpy as jnp
from jax.experimental import pallas as pl
from jax.experimental.pallas import tpu as pltpu


# ---------------------------------------------------------------------------
# small helpers
# ---------------------------------------------------------------------------
def _round_up(x, m):
    return ((x + m - 1) // m) * m


def _pick_tile(dim, pref, gran):
    """Largest tile <= pref that divides dim (dim must be a multiple of gran)."""
    if dim <= pref:
        return dim
    t = (pref // gran) * gran
    while dim % t:
        t -= gran
    return t


def _pad2(a, rows, cols):
    out = jnp.zeros((rows, cols), a.dtype)
    return out.at[: a.shape[0], : a.shape[1]].set(a)


def _flatten(x):
    return x.reshape(x.shape[0], -1) if x.ndim > 2 else x


def _vmem_capacity_bytes():
    try:
        return int(pltpu.get_tpu_info().vmem_capacity_bytes)
    except Exception:
        return 64 * 1024 * 1024       # conservative (v7x per-TensorCore VMEM)


_VMEM_CAP = _vmem_capacity_bytes()
# Fused-path budget: ~45% of physical VMEM (generation-aware: ~28 MiB on v7x,
# ~57 MiB on v5e/v6e).  Explicit scoped-VMEM limit with headroom above it.
_FUSED_VMEM_BUDGET = int(0.45 * _VMEM_CAP)
_FUSED_VMEM_LIMIT = min(_VMEM_CAP - (8 << 20), _FUSED_VMEM_BUDGET + (16 << 20))


def _fused_vmem_bytes(tm, din, h, dout, nh):
    """Honest VMEM estimate for the fused kernel (bf16 weights, f32 biases/io,
    double-buffered by the auto-pipeliner) + activation/compiler headroom."""
    nh_eff = max(nh, 1)
    w = 2 * (din * h + nh_eff * h * h + h * dout)      # bf16 weights
    b = 4 * (h + nh_eff * h + dout)                    # f32 fused biases
    io = 4 * (tm * din + tm * dout)                    # f32 x / out blocks
    total = 2 * (w + b + io)                           # double-buffering
    total += 4 * tm * h * 3 + (2 << 20)                # live h + scratch slack
    return int(total)


# ---------------------------------------------------------------------------
# Kernel 1: BOTH branches fused in one pallas_call (small/medium weight sets).
# Grid = (branch, batch-tile), both "parallel" (v7x: one branch per core).
# Weights stay resident in VMEM for the duration of a branch.
# ---------------------------------------------------------------------------
def _fused_mlp_kernel(n_hidden, x_ref, w_in_ref, c_in_ref, w_h_ref, c_h_ref,
                      w_out_ref, c_out_ref, o_ref):
    # input layer: relu(x @ W_in + c_in)   (BN already folded into W_in / c_in)
    x = x_ref[0].astype(jnp.bfloat16)
    h = jnp.dot(x, w_in_ref[0], preferred_element_type=jnp.float32)
    h = jnp.maximum(h + c_in_ref[0], 0.0)
    # hidden layers (statically unrolled; weights indexed from the VMEM stack)
    for l in range(n_hidden):
        h = jnp.dot(h.astype(jnp.bfloat16), w_h_ref[0, l],
                    preferred_element_type=jnp.float32)
        h = jnp.maximum(h + c_h_ref[0, l], 0.0)
    # output head (no BN / ReLU)
    y = jnp.dot(h.astype(jnp.bfloat16), w_out_ref[0],
                preferred_element_type=jnp.float32)
    o_ref[0] = (y + c_out_ref[0]).astype(o_ref.dtype)


def fused_mlp(xs, bp, n_hidden, tm):
    """xs:[2, B_pad, Din_p] f32; bp holds stacked padded fused params.
    Returns [2, B_pad, Dout_p] f32."""
    _, b_pad, din_p = xs.shape
    h_p = bp["w_in"].shape[2]
    dout_p = bp["w_out"].shape[2]
    nh_eff = bp["w_h"].shape[1]            # >= 1 (dummy slab if n_hidden == 0)

    flops = 4 * b_pad * (din_p * h_p + n_hidden * h_p * h_p + h_p * dout_p)
    bytes_accessed = (xs.size * 4
                      + (bp["w_in"].size + bp["w_h"].size + bp["w_out"].size) * 2
                      + (bp["c_in"].size + bp["c_h"].size + bp["c_out"].size) * 4
                      + 2 * b_pad * dout_p * 4)

    kernel = functools.partial(_fused_mlp_kernel, n_hidden)
    return pl.pallas_call(
        kernel,
        out_shape=jax.ShapeDtypeStruct((2, b_pad, dout_p), jnp.float32),
        grid_spec=pltpu.PrefetchScalarGridSpec(
            num_scalar_prefetch=0,
            grid=(2, b_pad // tm),
            in_specs=[
                pl.BlockSpec((1, tm, din_p), lambda b, i: (b, i, 0)),
                pl.BlockSpec((1, din_p, h_p), lambda b, i: (b, 0, 0)),
                pl.BlockSpec((1, 1, h_p), lambda b, i: (b, 0, 0)),
                pl.BlockSpec((1, nh_eff, h_p, h_p), lambda b, i: (b, 0, 0, 0)),
                pl.BlockSpec((1, nh_eff, 1, h_p), lambda b, i: (b, 0, 0, 0)),
                pl.BlockSpec((1, h_p, dout_p), lambda b, i: (b, 0, 0)),
                pl.BlockSpec((1, 1, dout_p), lambda b, i: (b, 0, 0)),
            ],
            out_specs=pl.BlockSpec((1, tm, dout_p), lambda b, i: (b, i, 0)),
        ),
        compiler_params=pltpu.CompilerParams(
            dimension_semantics=("parallel", "parallel"),
            vmem_limit_bytes=_FUSED_VMEM_LIMIT),
        cost_estimate=pl.CostEstimate(flops=flops, transcendentals=0,
                                      bytes_accessed=bytes_accessed),
    )(xs, bp["w_in"], bp["c_in"], bp["w_h"], bp["c_h"],
      bp["w_out"], bp["c_out"])


# ---------------------------------------------------------------------------
# Kernel 2: (M, N, K)-tiled linear (+ optional ReLU) with f32 accumulator.
# Fallback path for configurations whose weights don't fit VMEM in one shot.
# Operands are cast to bf16 for the MXU; weights stream from HBM in bf16.
# ---------------------------------------------------------------------------
def _tiled_linear_kernel(relu, x_ref, w_ref, c_ref, o_ref, acc_ref):
    k = pl.program_id(2)

    @pl.when(k == 0)
    def _():
        acc_ref[...] = jnp.zeros_like(acc_ref)

    acc_ref[...] += jnp.dot(x_ref[...].astype(jnp.bfloat16),
                            w_ref[...].astype(jnp.bfloat16),
                            preferred_element_type=jnp.float32)

    @pl.when(k == pl.num_programs(2) - 1)
    def _():
        y = acc_ref[...] + c_ref[...]      # (tm, tn) + (1, tn)
        if relu:
            y = jnp.maximum(y, 0.0)
        o_ref[...] = y.astype(o_ref.dtype)


def tiled_linear(x, w, c, *, relu, tm=None, tn=None, tk=None):
    """x:[B,K] (B % 8 == 0), w:[K,N], c:[1,N]; K, N multiples of 128."""
    B, K = x.shape
    N = w.shape[1]
    tm = tm if tm is not None else _pick_tile(B, 256, 8)
    tn = tn if tn is not None else _pick_tile(N, 512, 128)
    tk = tk if tk is not None else _pick_tile(K, 512, 128)

    flops = 2 * B * K * N
    bytes_accessed = (B * K * x.dtype.itemsize + K * N * w.dtype.itemsize
                      + N * 4 + B * N * 4)

    kernel = functools.partial(_tiled_linear_kernel, relu)
    return pl.pallas_call(
        kernel,
        out_shape=jax.ShapeDtypeStruct((B, N), jnp.float32),
        grid_spec=pltpu.PrefetchScalarGridSpec(
            num_scalar_prefetch=0,
            grid=(B // tm, N // tn, K // tk),
            in_specs=[
                pl.BlockSpec((tm, tk), lambda i, j, k: (i, k)),
                pl.BlockSpec((tk, tn), lambda i, j, k: (k, j)),
                pl.BlockSpec((1, tn), lambda i, j, k: (0, j)),
            ],
            out_specs=pl.BlockSpec((tm, tn), lambda i, j, k: (i, j)),
            scratch_shapes=[pltpu.VMEM((tm, tn), jnp.float32)],
        ),
        compiler_params=pltpu.CompilerParams(
            dimension_semantics=("parallel", "parallel", "arbitrary")),
        cost_estimate=pl.CostEstimate(flops=flops, transcendentals=0,
                                      bytes_accessed=bytes_accessed),
    )(x, w, c)


# ---------------------------------------------------------------------------
# Parameter construction (deterministic, synthetic) with BN folded offline.
# ---------------------------------------------------------------------------
def init_mlp_params(key, num_layers, input_size, hidden_size,
                    output_size1, output_size2, bn_eps=1e-5):
    def linear(k, fan_in, fan_out):
        kw, kb = jax.random.split(k)
        bound = 1.0 / math.sqrt(fan_in)
        w = jax.random.uniform(kw, (fan_in, fan_out), jnp.float32, -bound, bound)
        b = jax.random.uniform(kb, (1, fan_out), jnp.float32, -bound, bound)
        return w, b

    def bn_affine(k, n):
        kg, kb, km, kv = jax.random.split(k, 4)
        gamma = 1.0 + 0.1 * jax.random.normal(kg, (1, n), jnp.float32)
        beta = 0.1 * jax.random.normal(kb, (1, n), jnp.float32)
        mean = 0.1 * jax.random.normal(km, (1, n), jnp.float32)
        var = 1.0 + 0.1 * jax.random.uniform(kv, (1, n), jnp.float32)
        scale = gamma / jnp.sqrt(var + bn_eps)     # eval-mode BN fold
        shift = beta - mean * scale
        return scale, shift

    keys = iter(jax.random.split(key, 4 * num_layers + 8))
    params = {}
    for branch in ("branch1", "branch2"):
        w, b = linear(next(keys), input_size, hidden_size)
        s, sh = bn_affine(next(keys), hidden_size)
        bp = {"w_in": w * s, "c_in": b * s + sh, "w_h": [], "c_h": []}
        for _ in range(num_layers - 1):
            w, b = linear(next(keys), hidden_size, hidden_size)
            s, sh = bn_affine(next(keys), hidden_size)
            bp["w_h"].append(w * s)
            bp["c_h"].append(b * s + sh)
        params[branch] = bp
    params["branch1"]["w_out"], params["branch1"]["c_out"] = linear(
        next(keys), hidden_size, output_size1)
    params["branch2"]["w_out"], params["branch2"]["c_out"] = linear(
        next(keys), hidden_size, output_size2)
    return params


def pad_params(params):
    """Zero-pad all feature dims to multiples of 128 (lane-dense tiles), cast
    the matmul weights to bf16 and stack the two branches along a leading
    size-2 axis (both output heads padded to the common max width)."""
    b1, b2 = params["branch1"], params["branch2"]
    din, h = b1["w_in"].shape
    assert b2["w_in"].shape == (din, h)
    dout1 = b1["w_out"].shape[1]
    dout2 = b2["w_out"].shape[1]
    din_p = _round_up(din, 128)
    h_p = _round_up(h, 128)
    dout_p = _round_up(max(dout1, dout2), 128)
    nh = len(b1["w_h"])

    def stack2(f):
        return jnp.stack([f(b1), f(b2)])

    w_in = stack2(lambda bp: _pad2(bp["w_in"], din_p, h_p)).astype(jnp.bfloat16)
    c_in = stack2(lambda bp: _pad2(bp["c_in"], 1, h_p))
    if nh:
        w_h = jnp.stack([jnp.stack([_pad2(w, h_p, h_p) for w in bp["w_h"]])
                         for bp in (b1, b2)]).astype(jnp.bfloat16)
        c_h = jnp.stack([jnp.stack([_pad2(c, 1, h_p) for c in bp["c_h"]])
                         for bp in (b1, b2)])
    else:  # dummy slab, never read (hidden-layer loop count is 0)
        w_h = jnp.zeros((2, 1, h_p, h_p), jnp.bfloat16)
        c_h = jnp.zeros((2, 1, 1, h_p), jnp.float32)
    w_out = stack2(lambda bp: _pad2(bp["w_out"], h_p, dout_p)).astype(jnp.bfloat16)
    c_out = stack2(lambda bp: _pad2(bp["c_out"], 1, dout_p))
    return {"w_in": w_in, "c_in": c_in, "w_h": w_h, "c_h": c_h,
            "w_out": w_out, "c_out": c_out}


# ---------------------------------------------------------------------------
# Forward pass (mirrors MLP.forward)
# ---------------------------------------------------------------------------
@functools.partial(
    jax.jit,
    static_argnames=("num_layers", "out1_size", "out2_size", "force_tiled"))
def mlp_forward(padded_params, x1, x2, *, num_layers, out1_size, out2_size,
                force_tiled=False):
    x1 = _flatten(x1)
    x2 = _flatten(x2)
    B = x1.shape[0]
    B_pad = _round_up(max(B, 8), 8)
    n_hidden = num_layers - 1
    bp = padded_params
    din_p, h_p = bp["w_in"].shape[1], bp["w_in"].shape[2]
    dout_p = bp["w_out"].shape[2]

    # Stacked, zero-padded input slab [2, B_pad, din_p].
    xs = jnp.zeros((2, B_pad, din_p), jnp.float32)
    xs = xs.at[0, :B, : x1.shape[1]].set(x1.astype(jnp.float32))
    xs = xs.at[1, :B, : x2.shape[1]].set(x2.astype(jnp.float32))

    tm = _pick_tile(B_pad, 256, 8)
    use_fused = (not force_tiled) and (
        _fused_vmem_bytes(tm, din_p, h_p, dout_p, n_hidden)
        < _FUSED_VMEM_BUDGET)

    if use_fused:
        y = fused_mlp(xs, bp, n_hidden, tm)              # [2, B_pad, dout_p]
        out1 = y[0, :B, :out1_size]
        out2 = y[1, :B, :out2_size]
    else:
        # per-layer (M, N, K)-tiled path for large weight sets
        outs = []
        for b in range(2):
            h = tiled_linear(xs[b], bp["w_in"][b], bp["c_in"][b], relu=True)
            for l in range(n_hidden):
                h = tiled_linear(h, bp["w_h"][b, l], bp["c_h"][b, l], relu=True)
            outs.append(tiled_linear(h, bp["w_out"][b], bp["c_out"][b],
                                     relu=False))
        out1 = outs[0][:B, :out1_size]
        out2 = outs[1][:B, :out2_size]
    return out1, out2


# ---------------------------------------------------------------------------
# Pure-JAX reference (unpadded, fused-BN params, f32)
# ---------------------------------------------------------------------------
def mlp_forward_ref(params, x1, x2):
    x1 = _flatten(x1)
    x2 = _flatten(x2)
    outs = []
    for x, branch in ((x1, "branch1"), (x2, "branch2")):
        bp = params[branch]
        h = jnp.maximum(x @ bp["w_in"] + bp["c_in"], 0.0)
        for w, c in zip(bp["w_h"], bp["c_h"]):
            h = jnp.maximum(h @ w + c, 0.0)
        outs.append(h @ bp["w_out"] + bp["c_out"])
    return tuple(outs)


if __name__ == "__main__":
    # small, module-consistent shapes
    num_layers = 2
    batch = 2
    C, H, W = 4, 4, 4
    input_size = C * H * W          # 64 after flatten
    hidden_size = 32
    output_size1 = 100
    output_size2 = 1000

    root = jax.random.PRNGKey(0)
    kp, kx1, kx2, kt = jax.random.split(root, 4)

    params = init_mlp_params(kp, num_layers, input_size, hidden_size,
                             output_size1, output_size2)
    padded = pad_params(params)

    x1 = jax.random.normal(kx1, (batch, C, H, W), jnp.float32)   # >2-D: flattened
    x2 = jax.random.normal(kx2, (batch, input_size), jnp.float32)

    ref1, ref2 = mlp_forward_ref(params, x1, x2)

    # 1) single fused two-branch kernel path (used at these shapes)
    out1, out2 = mlp_forward(padded, x1, x2, num_layers=num_layers,
                             out1_size=output_size1, out2_size=output_size2)
    out1, out2 = jax.block_until_ready((out1, out2))
    assert out1.shape == (batch, output_size1)
    assert out2.shape == (batch, output_size2)
    # bf16 MXU operands -> loosened tolerances vs the f32 reference
    assert jnp.allclose(out1, ref1, atol=2e-2, rtol=2e-2)
    assert jnp.allclose(out2, ref2, atol=2e-2, rtol=2e-2)

    # 2) tiled per-layer fallback path (used for very large configurations)
    t1, t2 = mlp_forward(padded, x1, x2, num_layers=num_layers,
                         out1_size=output_size1, out2_size=output_size2,
                         force_tiled=True)
    t1, t2 = jax.block_until_ready((t1, t2))
    assert jnp.allclose(t1, ref1, atol=2e-2, rtol=2e-2)
    assert jnp.allclose(t2, ref2, atol=2e-2, rtol=2e-2)

    # 3) exercise the K-accumulator of the tiled kernel on a multi-step grid
    ka, kb_, kc = jax.random.split(kt, 3)
    xa = jax.random.normal(ka, (64, 256), jnp.float32)
    wa = 0.05 * jax.random.normal(kb_, (256, 384), jnp.float32)
    ca = jax.random.normal(kc, (1, 384), jnp.float32)
    ya = jax.block_until_ready(
        tiled_linear(xa, wa, ca, relu=True, tm=32, tn=128, tk=128))
    ra = jnp.maximum(
        jnp.dot(xa, wa, precision=jax.lax.Precision.HIGHEST) + ca, 0.0)
    assert jnp.allclose(ya, ra, atol=3e-2, rtol=3e-2)

    print("KERNEL_OK")
</pallas_src>

<mosaic_0001>
module attributes {stable_mosaic.version = 11 : i64} {
  func.func @_fused_mlp_kernel(%arg0: i32, %arg1: i32, %arg2: memref<1x8x128xf32, #tpu.memory_space<vmem>>, %arg3: memref<1x128x128xbf16, #tpu.memory_space<vmem>>, %arg4: memref<1x1x128xf32, #tpu.memory_space<vmem>>, %arg5: memref<1x1x128x128xbf16, #tpu.memory_space<vmem>>, %arg6: memref<1x1x1x128xf32, #tpu.memory_space<vmem>>, %arg7: memref<1x128x1024xbf16, #tpu.memory_space<vmem>>, %arg8: memref<1x1x1024xf32, #tpu.memory_space<vmem>>, %arg9: memref<1x8x1024xf32, #tpu.memory_space<vmem>>) attributes {dimension_semantics = [#tpu.dimension_semantics<parallel>, #tpu.dimension_semantics<parallel>], iteration_bounds = array<i64: 2, 1>, scalar_prefetch = 0 : i64, scratch_operands = 0 : i64, tpu.core_type = #tpu.core_type<tc>, window_params = [{transform_indices = @transform_0, window_bounds = array<i64: 1, 8, 128>}, {transform_indices = @transform_1, window_bounds = array<i64: 1, 128, 128>}, {transform_indices = @transform_2, window_bounds = array<i64: 1, 1, 128>}, {transform_indices = @transform_3, window_bounds = array<i64: 1, 1, 128, 128>}, {transform_indices = @transform_4, window_bounds = array<i64: 1, 1, 1, 128>}, {transform_indices = @transform_5, window_bounds = array<i64: 1, 128, 1024>}, {transform_indices = @transform_6, window_bounds = array<i64: 1, 1, 1024>}, {transform_indices = @transform_7, window_bounds = array<i64: 1, 8, 1024>}]} {
    %c0 = arith.constant 0 : index
    %c0_0 = arith.constant 0 : index
    %c0_1 = arith.constant 0 : index
    %0 = vector.load %arg2[%c0, %c0_0, %c0_1] : memref<1x8x128xf32, #tpu.memory_space<vmem>>, vector<1x8x128xf32>
    %1 = vector.shape_cast %0 : vector<1x8x128xf32> to vector<8x128xf32>
    %2 = arith.truncf %1 : vector<8x128xf32> to vector<8x128xbf16>
    %c0_2 = arith.constant 0 : index
    %c0_3 = arith.constant 0 : index
    %c0_4 = arith.constant 0 : index
    %3 = vector.load %arg3[%c0_2, %c0_3, %c0_4] : memref<1x128x128xbf16, #tpu.memory_space<vmem>>, vector<1x128x128xbf16>
    %4 = vector.shape_cast %3 : vector<1x128x128xbf16> to vector<128x128xbf16>
    %cst = arith.constant dense<0.000000e+00> : vector<8x128xf32>
    %5 = tpu.matmul %2, %4, %cst {dimension_numbers = #tpu.dot_dimension_numbers<[1], [0], [0], [1], [0, 0, 1, 1], [], []>} : vector<8x128xbf16>, vector<128x128xbf16>, vector<8x128xf32> -> vector<8x128xf32>
    %c0_5 = arith.constant 0 : index
    %c0_6 = arith.constant 0 : index
    %c0_7 = arith.constant 0 : index
    %6 = vector.load %arg4[%c0_5, %c0_6, %c0_7] : memref<1x1x128xf32, #tpu.memory_space<vmem>>, vector<1x1x128xf32>
    %7 = vector.shape_cast %6 : vector<1x1x128xf32> to vector<1x128xf32>
    %8 = vector.broadcast %7 : vector<1x128xf32> to vector<8x128xf32>
    %9 = arith.addf %5, %8 : vector<8x128xf32>
    %cst_8 = arith.constant 0.000000e+00 : f32
    %10 = vector.broadcast %cst_8 : f32 to vector<8x128xf32>
    %11 = arith.maximumf %9, %10 : vector<8x128xf32>
    %12 = arith.truncf %11 : vector<8x128xf32> to vector<8x128xbf16>
    %c0_9 = arith.constant 0 : index
    %c0_10 = arith.constant 0 : index
    %c0_11 = arith.constant 0 : index
    %c0_12 = arith.constant 0 : index
    %13 = vector.load %arg5[%c0_9, %c0_10, %c0_11, %c0_12] : memref<1x1x128x128xbf16, #tpu.memory_space<vmem>>, vector<1x1x128x128xbf16>
    %14 = vector.shape_cast %13 : vector<1x1x128x128xbf16> to vector<128x128xbf16>
    %cst_13 = arith.constant dense<0.000000e+00> : vector<8x128xf32>
    %15 = tpu.matmul %12, %14, %cst_13 {dimension_numbers = #tpu.dot_dimension_numbers<[1], [0], [0], [1], [0, 0, 1, 1], [], []>} : vector<8x128xbf16>, vector<128x128xbf16>, vector<8x128xf32> -> vector<8x128xf32>
    %c0_14 = arith.constant 0 : index
    %c0_15 = arith.constant 0 : index
    %c0_16 = arith.constant 0 : index
    %c0_17 = arith.constant 0 : index
    %16 = vector.load %arg6[%c0_14, %c0_15, %c0_16, %c0_17] : memref<1x1x1x128xf32, #tpu.memory_space<vmem>>, vector<1x1x1x128xf32>
    %17 = vector.shape_cast %16 : vector<1x1x1x128xf32> to vector<1x128xf32>
    %18 = vector.broadcast %17 : vector<1x128xf32> to vector<8x128xf32>
    %19 = arith.addf %15, %18 : vector<8x128xf32>
    %cst_18 = arith.constant 0.000000e+00 : f32
    %20 = vector.broadcast %cst_18 : f32 to vector<8x128xf32>
    %21 = arith.maximumf %19, %20 : vector<8x128xf32>
    %22 = arith.truncf %21 : vector<8x128xf32> to vector<8x128xbf16>
    %c0_19 = arith.constant 0 : index
    %c0_20 = arith.constant 0 : index
    %c0_21 = arith.constant 0 : index
    %23 = vector.load %arg7[%c0_19, %c0_20, %c0_21] : memref<1x128x1024xbf16, #tpu.memory_space<vmem>>, vector<1x128x1024xbf16>
    %24 = vector.shape_cast %23 : vector<1x128x1024xbf16> to vector<128x1024xbf16>
    %cst_22 = arith.constant dense<0.000000e+00> : vector<8x1024xf32>
    %25 = tpu.matmul %22, %24, %cst_22 {dimension_numbers = #tpu.dot_dimension_numbers<[1], [0], [0], [1], [0, 0, 1, 1], [], []>} : vector<8x128xbf16>, vector<128x1024xbf16>, vector<8x1024xf32> -> vector<8x1024xf32>
    %c0_23 = arith.constant 0 : index
    %c0_24 = arith.constant 0 : index
    %c0_25 = arith.constant 0 : index
    %26 = vector.load %arg8[%c0_23, %c0_24, %c0_25] : memref<1x1x1024xf32, #tpu.memory_space<vmem>>, vector<1x1x1024xf32>
    %27 = vector.shape_cast %26 : vector<1x1x1024xf32> to vector<1x1024xf32>
    %28 = vector.broadcast %27 : vector<1x1024xf32> to vector<8x1024xf32>
    %29 = arith.addf %25, %28 : vector<8x1024xf32>
    %c0_26 = arith.constant 0 : index
    %c0_27 = arith.constant 0 : index
    %c0_28 = arith.constant 0 : index
    %30 = vector.load %arg9[%c0_26, %c0_27, %c0_28] : memref<1x8x1024xf32, #tpu.memory_space<vmem>>, vector<1x8x1024xf32>
    %31 = vector.shape_cast %30 : vector<1x8x1024xf32> to vector<8x1024xf32>
    %32 = vector.shape_cast %29 : vector<8x1024xf32> to vector<1x8x1024xf32>
    tpu.vector_store %arg9[%c0_26, %c0_27, %c0_28], %32 {strides = array<i32>} : memref<1x8x1024xf32, #tpu.memory_space<vmem>>, vector<1x8x1024xf32>,
    return
  }
  func.func @transform_0(%arg0: i32, %arg1: i32) -> (i32, i32, i32) {
    %c0_i32 = arith.constant 0 : i32
    %c0_i32_0 = arith.constant 0 : i32
    return %arg0, %arg1, %c0_i32 : i32, i32, i32
  }
  func.func @transform_1(%arg0: i32, %arg1: i32) -> (i32, i32, i32) {
    %c0_i32 = arith.constant 0 : i32
    %c0_i32_0 = arith.constant 0 : i32
    %c0_i32_1 = arith.constant 0 : i32
    return %arg0, %c0_i32, %c0_i32_0 : i32, i32, i32
  }
  func.func @transform_2(%arg0: i32, %arg1: i32) -> (i32, i32, i32) {
    %c0_i32 = arith.constant 0 : i32
    %c0_i32_0 = arith.constant 0 : i32
    %c0_i32_1 = arith.constant 0 : i32
    return %arg0, %c0_i32, %c0_i32_0 : i32, i32, i32
  }
  func.func @transform_3(%arg0: i32, %arg1: i32) -> (i32, i32, i32, i32) {
    %c0_i32 = arith.constant 0 : i32
    %c0_i32_0 = arith.constant 0 : i32
    %c0_i32_1 = arith.constant 0 : i32
    %c0_i32_2 = arith.constant 0 : i32
    return %arg0, %c0_i32, %c0_i32_0, %c0_i32_1 : i32, i32, i32, i32
  }
  func.func @transform_4(%arg0: i32, %arg1: i32) -> (i32, i32, i32, i32) {
    %c0_i32 = arith.constant 0 : i32
    %c0_i32_0 = arith.constant 0 : i32
    %c0_i32_1 = arith.constant 0 : i32
    %c0_i32_2 = arith.constant 0 : i32
    return %arg0, %c0_i32, %c0_i32_0, %c0_i32_1 : i32, i32, i32, i32
  }
  func.func @transform_5(%arg0: i32, %arg1: i32) -> (i32, i32, i32) {
    %c0_i32 = arith.constant 0 : i32
    %c0_i32_0 = arith.constant 0 : i32
    %c0_i32_1 = arith.constant 0 : i32
    return %arg0, %c0_i32, %c0_i32_0 : i32, i32, i32
  }
  func.func @transform_6(%arg0: i32, %arg1: i32) -> (i32, i32, i32) {
    %c0_i32 = arith.constant 0 : i32
    %c0_i32_0 = arith.constant 0 : i32
    %c0_i32_1 = arith.constant 0 : i32
    return %arg0, %c0_i32, %c0_i32_0 : i32, i32, i32
  }
  func.func @transform_7(%arg0: i32, %arg1: i32) -> (i32, i32, i32) {
    %c0_i32 = arith.constant 0 : i32
    %c0_i32_0 = arith.constant 0 : i32
    return %arg0, %arg1, %c0_i32 : i32, i32, i32
  }
}

</mosaic_0001>

<llo_original>
// kernel: mlp_forward.1
$region0: #{mlp_forward.1}
  #allocation0 [shape = 'u32[]', space=smem, size = 0x4, offset = 0x4, fixed_abs, tag = 'smem constant byte address 0x4 - core index']
  #allocation1 [shape = 'u32[144,128]{1,0:T(1,128)}', space=vmem, size = 0x12000, scoped, tag = 'internal scratch']
  %s0 = inlined_call_operand.vmem [shape: f32[2,8,128], index: 0, kind: input, shape index: {}]
  %s1 = inlined_call_operand.hbm [shape: bf16[2,128,128], index: 1, kind: input, shape index: {}]
  %s2 = inlined_call_operand.vmem [shape: f32[2,1,128], index: 2, kind: input, shape index: {}]
  %s3 = inlined_call_operand.hbm [shape: bf16[2,1,128,128], index: 3, kind: input, shape index: {}]
  %s4 = inlined_call_operand.vmem [shape: f32[2,1,1,128], index: 4, kind: input, shape index: {}]
  %s5 = inlined_call_operand.hbm [shape: bf16[2,128,1024], index: 5, kind: input, shape index: {}]
  %s6 = inlined_call_operand.vmem [shape: f32[2,1,1024], index: 6, kind: input, shape index: {}]
  %s7 = inlined_call_operand.vmem [shape: f32[2,8,1024], index: 7, kind: output, shape index: {}]
  %s8 = sld [smem:[#allocation0]]
  $region73: #{mlp_forward.1} parent=0
    _
  %s10 = ssub.s32 1, %s8
  %s11 = scalar_select 0, %s10, %s8
  $region1: #{mlp_forward.1} parent=0
    #allocation2 [shape = 'u8[65536]{0}', space=vmem, size = 0x10000, scoped, tag = 'input window, operand 1']
    #allocation3 [shape = 's32[2]{0}', space=sflag, size = 0x8, scoped, tag = 'scoped memory for mlp_forward.1']
    #allocation4 [shape = 'u8[65536]{0}', space=vmem, size = 0x10000, scoped, tag = 'input window, operand 3']
    #allocation5 [shape = 's32[2]{0}', space=sflag, size = 0x8, scoped, tag = 'scoped memory for mlp_forward.1']
    #allocation6 [shape = 'u8[524288]{0}', space=vmem, size = 0x80000, scoped, tag = 'input window, operand 5']
    %12 = vsyncpa [#allocation3], 0
    %s13 = scalar_lea.sflag [#allocation3], 1
    %14 = vsyncpa %s13, 0
    %15 = vsyncpa [#allocation5], 0
    %s16 = scalar_lea.sflag [#allocation5], 1
    %17 = vsyncpa %s16, 0
    loop: start=0, step=1, limit=4
    $region2: #{mlp_forward.1} parent=1 // loop_pre_header
      _
    $region3: #{mlp_forward.1} parent=1 // loop_header
      %s19 = sphi 0, %s23
      %p20 = scmp.ge.s32.totalorder %s19, 4
      %s26 = sphi 0, %s38
      %s27 = sphi 0, %s34
      %s28 = sphi 0, %s26
      %s29 = sphi 0, %s27
      %s30 = sphi 0, %s28
      %s31 = sphi 0, %s29
      %s43 = sphi 0, %s45
      %s46 = sphi 0, %s43
      %s47 = sphi 0, %s46
      %s63 = sphi 0, %s47
      %s69 = sphi 0, %s71
      %s72 = sphi 0, %s69
      %s73 = sphi 0, %s72
      %s89 = sphi 0, %s73
      %s95 = sphi 0, %s97
      %s98 = sphi 0, %s95
      %s99 = sphi 0, %s98
      %s115 = sphi 0, %s99
      %s121 = sphi 0, %s123
      %s124 = sphi 0, %s121
      %s125 = sphi 0, %s124
      %s141 = sphi 0, %s125
      %s147 = sphi 0, %s149
      %s150 = sphi 0, %s147
      %s151 = sphi 0, %s150
      %s167 = sphi 0, %s151
      %s173 = sphi 0, %s175
      %s176 = sphi 0, %s173
      %s177 = sphi 0, %s176
      %s193 = sphi 0, %s177
      %s199 = sphi 0, %s201
      %s202 = sphi 0, %s199
      %s203 = sphi 0, %s202
      %s219 = sphi 0, %s203
      %s227 = sphi 0, %s229
      %s230 = sphi 0, %s227
      %s231 = sphi 0, %s230
      %s247 = sphi 0, %s231
    $region4: #{mlp_forward.1} parent=1 // loop_header_branch
      %22 = sbr.rel (%p20) target = $region8
    $region5: #{mlp_forward.1} parent=1 // loop_body
      %s24 = ssub.s32 %s19, 1
      %s25 = ssub.s32 %s19, 2
      %s32 = sadd.s32 1, %s27
      %p33 = scmp.ge.s32.totalorder %s32, 1
      %s34 = scalar_select %p33, 0, %s32
      %s35 = sadd.s32 1, %s26
      %s36 = scalar_select %p33, %s35, %s26
      %p37 = scmp.ge.s32.totalorder %s36, 2
      %s38 = scalar_select %p37, 0, %s36
      %s39 = ssub.s32 %s26, %s38
      %s40 = ssub.s32 %s27, %s34
      %s41 = sor.u32 %s39, %s40
      %p42 = scmp.eq.s32.totalorder %s41, 0
      %s44 = sadd.s32 %s43, 1
      %s45 = scalar_select %p42, %s43, %s44
      %p48 = pneg %p42
      %p49 = scmp.eq.s32.totalorder %s19, 1
      %p50 = por %p48, %p49
      %p51 = scmp.ne.s32.totalorder %s43, %s46
      %p52 = scmp.eq.s32.totalorder %s19, 0
      %p53 = por %p51, %p52
      %p54 = scmp.ne.s32.totalorder %s43, %s46
      %p55 = scmp.eq.s32.totalorder %s24, 1
      %p56 = por %p54, %p55
      %p57 = scmp.ne.s32.totalorder %s46, %s47
      %p58 = scmp.eq.s32.totalorder %s24, 0
      %p59 = por %p57, %p58
      %p60 = scmp.ne.s32.totalorder %s46, %s47
      %p61 = scmp.eq.s32.totalorder %s25, 1
      %p62 = por %p60, %p61
      %p64 = scmp.ne.s32.totalorder %s47, %s63
      %p65 = scmp.eq.s32.totalorder %s25, 0
      %p66 = por %p64, %p65
      %s67 = ssub.s32 %s26, %s38
      %p68 = scmp.eq.s32.totalorder %s67, 0
      %s70 = sadd.s32 %s69, 1
      %s71 = scalar_select %p68, %s69, %s70
      %p74 = pneg %p68
      %p75 = scmp.eq.s32.totalorder %s19, 1
      %p76 = por %p74, %p75
      %p77 = scmp.ne.s32.totalorder %s69, %s72
      %p78 = scmp.eq.s32.totalorder %s19, 0
      %p79 = por %p77, %p78
      %p80 = scmp.ne.s32.totalorder %s69, %s72
      %p81 = scmp.eq.s32.totalorder %s24, 1
      %p82 = por %p80, %p81
      %p83 = scmp.ne.s32.totalorder %s72, %s73
      %p84 = scmp.eq.s32.totalorder %s24, 0
      %p85 = por %p83, %p84
      %p86 = scmp.ne.s32.totalorder %s72, %s73
      %p87 = scmp.eq.s32.totalorder %s25, 1
      %p88 = por %p86, %p87
      %p90 = scmp.ne.s32.totalorder %s73, %s89
      %p91 = scmp.eq.s32.totalorder %s25, 0
      %p92 = por %p90, %p91
      %s93 = ssub.s32 %s26, %s38
      %p94 = scmp.eq.s32.totalorder %s93, 0
      %s96 = sadd.s32 %s95, 1
      %s97 = scalar_select %p94, %s95, %s96
      %p100 = pneg %p94
      %p101 = scmp.eq.s32.totalorder %s19, 1
      %p102 = por %p100, %p101
      %p103 = scmp.ne.s32.totalorder %s95, %s98
      %p104 = scmp.eq.s32.totalorder %s19, 0
      %p105 = por %p103, %p104
      %p106 = scmp.ne.s32.totalorder %s95, %s98
      %p107 = scmp.eq.s32.totalorder %s24, 1
      %p108 = por %p106, %p107
      %p109 = scmp.ne.s32.totalorder %s98, %s99
      %p110 = scmp.eq.s32.totalorder %s24, 0
      %p111 = por %p109, %p110
      %p112 = scmp.ne.s32.totalorder %s98, %s99
      %p113 = scmp.eq.s32.totalorder %s25, 1
      %p114 = por %p112, %p113
      %p116 = scmp.ne.s32.totalorder %s99, %s115
      %p117 = scmp.eq.s32.totalorder %s25, 0
      %p118 = por %p116, %p117
      %s119 = ssub.s32 %s26, %s38
      %p120 = scmp.eq.s32.totalorder %s119, 0
      %s122 = sadd.s32 %s121, 1
      %s123 = scalar_select %p120, %s121, %s122
      %p126 = pneg %p120
      %p127 = scmp.eq.s32.totalorder %s19, 1
      %p128 = por %p126, %p127
      %p129 = scmp.ne.s32.totalorder %s121, %s124
      %p130 = scmp.eq.s32.totalorder %s19, 0
      %p131 = por %p129, %p130
      %p132 = scmp.ne.s32.totalorder %s121, %s124
      %p133 = scmp.eq.s32.totalorder %s24, 1
      %p134 = por %p132, %p133
      %p135 = scmp.ne.s32.totalorder %s124, %s125
      %p136 = scmp.eq.s32.totalorder %s24, 0
      %p137 = por %p135, %p136
      %p138 = scmp.ne.s32.totalorder %s124, %s125
      %p139 = scmp.eq.s32.totalorder %s25, 1
      %p140 = por %p138, %p139
      %p142 = scmp.ne.s32.totalorder %s125, %s141
      %p143 = scmp.eq.s32.totalorder %s25, 0
      %p144 = por %p142, %p143
      %s145 = ssub.s32 %s26, %s38
      %p146 = scmp.eq.s32.totalorder %s145, 0
      %s148 = sadd.s32 %s147, 1
      %s149 = scalar_select %p146, %s147, %s148
      %p152 = pneg %p146
      %p153 = scmp.eq.s32.totalorder %s19, 1
      %p154 = por %p152, %p153
      %p155 = scmp.ne.s32.totalorder %s147, %s150
      %p156 = scmp.eq.s32.totalorder %s19, 0
      %p157 = por %p155, %p156
      %p158 = scmp.ne.s32.totalorder %s147, %s150
      %p159 = scmp.eq.s32.totalorder %s24, 1
      %p160 = por %p158, %p159
      %p161 = scmp.ne.s32.totalorder %s150, %s151
      %p162 = scmp.eq.s32.totalorder %s24, 0
      %p163 = por %p161, %p162
      %p164 = scmp.ne.s32.totalorder %s150, %s151
      %p165 = scmp.eq.s32.totalorder %s25, 1
      %p166 = por %p164, %p165
      %p168 = scmp.ne.s32.totalorder %s151, %s167
      %p169 = scmp.eq.s32.totalorder %s25, 0
      %p170 = por %p168, %p169
      %s171 = ssub.s32 %s26, %s38
      %p172 = scmp.eq.s32.totalorder %s171, 0
      %s174 = sadd.s32 %s173, 1
      %s175 = scalar_select %p172, %s173, %s174
      %p178 = pneg %p172
      %p179 = scmp.eq.s32.totalorder %s19, 1
      %p180 = por %p178, %p179
      %p181 = scmp.ne.s32.totalorder %s173, %s176
      %p182 = scmp.eq.s32.totalorder %s19, 0
      %p183 = por %p181, %p182
      %p184 = scmp.ne.s32.totalorder %s173, %s176
      %p185 = scmp.eq.s32.totalorder %s24, 1
      %p186 = por %p184, %p185
      %p187 = scmp.ne.s32.totalorder %s176, %s177
      %p188 = scmp.eq.s32.totalorder %s24, 0
      %p189 = por %p187, %p188
      %p190 = scmp.ne.s32.totalorder %s176, %s177
      %p191 = scmp.eq.s32.totalorder %s25, 1
      %p192 = por %p190, %p191
      %p194 = scmp.ne.s32.totalorder %s177, %s193
      %p195 = scmp.eq.s32.totalorder %s25, 0
      %p196 = por %p194, %p195
      %s197 = ssub.s32 %s26, %s38
      %p198 = scmp.eq.s32.totalorder %s197, 0
      %s200 = sadd.s32 %s199, 1
      %s201 = scalar_select %p198, %s199, %s200
      %p204 = pneg %p198
      %p205 = scmp.eq.s32.totalorder %s19, 1
      %p206 = por %p204, %p205
      %p207 = scmp.ne.s32.totalorder %s199, %s202
      %p208 = scmp.eq.s32.totalorder %s19, 0
      %p209 = por %p207, %p208
      %p210 = scmp.ne.s32.totalorder %s199, %s202
      %p211 = scmp.eq.s32.totalorder %s24, 1
      %p212 = por %p210, %p211
      %p213 = scmp.ne.s32.totalorder %s202, %s203
      %p214 = scmp.eq.s32.totalorder %s24, 0
      %p215 = por %p213, %p214
      %p216 = scmp.ne.s32.totalorder %s202, %s203
      %p217 = scmp.eq.s32.totalorder %s25, 1
      %p218 = por %p216, %p217
      %p220 = scmp.ne.s32.totalorder %s203, %s219
      %p221 = scmp.eq.s32.totalorder %s25, 0
      %p222 = por %p220, %p221
      %s223 = ssub.s32 %s26, %s38
      %s224 = ssub.s32 %s27, %s34
      %s225 = sor.u32 %s223, %s224
      %p226 = scmp.eq.s32.totalorder %s225, 0
      %s228 = sadd.s32 %s227, 1
      %s229 = scalar_select %p226, %s227, %s228
      %p232 = pneg %p226
      %p233 = scmp.eq.s32.totalorder %s19, 1
      %p234 = por %p232, %p233
      %p235 = scmp.ne.s32.totalorder %s227, %s230
      %p236 = scmp.eq.s32.totalorder %s19, 0
      %p237 = por %p235, %p236
      %p238 = scmp.ne.s32.totalorder %s227, %s230
      %p239 = scmp.eq.s32.totalorder %s24, 1
      %p240 = por %p238, %p239
      %p241 = scmp.ne.s32.totalorder %s230, %s231
      %p242 = scmp.eq.s32.totalorder %s24, 0
      %p243 = por %p241, %p242
      %p244 = scmp.ne.s32.totalorder %s230, %s231
      %p245 = scmp.eq.s32.totalorder %s25, 1
      %p246 = por %p244, %p245
      %p248 = scmp.ne.s32.totalorder %s231, %s247
      %p249 = scmp.eq.s32.totalorder %s25, 0
      %p250 = por %p248, %p249
      %p251 = scmp.le.s32.totalorder 1, %s19
      %p252 = scmp.lt.s32.totalorder %s19, 3
      %p253 = pnand %p251, %p252
      %p254 = pneg %p253
      // Predicated region
      $region9: #{mlp_forward.1} parent=5 // pred_check
        _
      $region10: #{mlp_forward.1} parent=5 // pred_check_branch
        %256 = sbr.rel (%p253) target = $region12
      $region11: #{mlp_forward.1} parent=5 // pred_region
        %s257 = ssub.s32 %s19, 1
      $region12: #{mlp_forward.1} parent=5 // pred_fallthru
        _
      %p258 = scmp.lt.s32.totalorder %s19, 2
      // Predicated region
      $region13: #{mlp_forward.1} parent=5 // pred_check
        %p259 = pneg %p258
      $region14: #{mlp_forward.1} parent=5 // pred_check_branch
        %261 = sbr.rel (%p259) target = $region16
      $region15: #{mlp_forward.1} parent=5 // pred_region
        // Predicated region
        $region17: #{mlp_forward.1} parent=15 // pred_check
          %p262 = pneg %p53
        $region18: #{mlp_forward.1} parent=15 // pred_check_branch
          %264 = sbr.rel (%p262) target = $region20
        $region19: #{mlp_forward.1} parent=15 // pred_region
          %p265 = scmp.lt.s32.totalorder %s26, 1
          %s266 = scalar_select %p265, %s26, 1
          %p267 = scmp.lt.s32.totalorder %s27, 0
          %s268 = scalar_select %p267, %s27, 0
          %s269 = sadd.s32 %s268, %s266
          %s270 = smul.addr %s269, 8
          %s271 = scalar_lea.vmem %s0, %s270
        $region20: #{mlp_forward.1} parent=15 // pred_fallthru
          _
        // Predicated region
        $region21: #{mlp_forward.1} parent=15 // pred_check
          %p272 = pneg %p79
        $region22: #{mlp_forward.1} parent=15 // pred_check_branch
          %274 = sbr.rel (%p272) target = $region24
        $region23: #{mlp_forward.1} parent=15 // pred_region
          %s275 = sand.u32 %s69, 1
          %s276 = scalar_lea.sflag [#allocation3], %s275
          %s277 = sand.u32 %s69, 1
          %s278 = smul.addr %s277, 64
          %s279 = scalar_lea.vmem [#allocation2], %s278
          %s281 = ssub.s32 1024, 1024
          %282 = vsyncadd %s276, %s281
          %s283 = smul.addr %s26, 16
          %s284 = smul.addr %s283, 64
          %s285 = scalar_lea.hbm %s1, %s284
          %s286 = sshll.u32 %s279, 4
          %s287 = int_to_ptr.vmem [resolvable:$true] %s286
          %292 = dma.hbm_to_vmem [thread:$0]  %s285, 1024, %s287, %s276, 64, 64, 4
        $region24: #{mlp_forward.1} parent=15 // pred_fallthru
          _
        // Predicated region
        $region25: #{mlp_forward.1} parent=15 // pred_check
          %p293 = pneg %p105
        $region26: #{mlp_forward.1} parent=15 // pred_check_branch
          %295 = sbr.rel (%p293) target = $region28
        $region27: #{mlp_forward.1} parent=15 // pred_region
          %p296 = scmp.lt.s32.totalorder %s26, 1
          %s297 = scalar_select %p296, %s26, 1
          %s298 = scalar_lea.vmem %s2, %s297
        $region28: #{mlp_forward.1} parent=15 // pred_fallthru
          _
        // Predicated region
        $region29: #{mlp_forward.1} parent=15 // pred_check
          %p299 = pneg %p131
        $region30: #{mlp_forward.1} parent=15 // pred_check_branch
          %301 = sbr.rel (%p299) target = $region32
        $region31: #{mlp_forward.1} parent=15 // pred_region
          %s302 = sand.u32 %s19, 1
          %s303 = scalar_lea.sflag [#allocation5], %s302
          %s304 = sand.u32 %s121, 1
          %s305 = smul.addr %s304, 64
          %s306 = scalar_lea.vmem [#allocation4], %s305
          %s308 = ssub.s32 1024, 1024
          %309 = vsyncadd %s303, %s308
          %s310 = smul.addr %s26, 16
          %s311 = smul.addr %s310, 64
          %s312 = scalar_lea.hbm %s3, %s311
          %s313 = sshll.u32 %s306, 4
          %s314 = int_to_ptr.vmem [resolvable:$true] %s313
          %319 = dma.hbm_to_vmem [thread:$0]  %s312, 1024, %s314, %s303, 64, 64, 4
        $region32: #{mlp_forward.1} parent=15 // pred_fallthru
          _
        // Predicated region
        $region33: #{mlp_forward.1} parent=15 // pred_check
          %p320 = pneg %p157
        $region34: #{mlp_forward.1} parent=15 // pred_check_branch
          %322 = sbr.rel (%p320) target = $region36
        $region35: #{mlp_forward.1} parent=15 // pred_region
          %p323 = scmp.lt.s32.totalorder %s26, 1
          %s324 = scalar_select %p323, %s26, 1
          %s325 = scalar_lea.vmem %s4, %s324
        $region36: #{mlp_forward.1} parent=15 // pred_fallthru
          _
        // Predicated region
        $region37: #{mlp_forward.1} parent=15 // pred_check
          %p326 = pneg %p183
        $region38: #{mlp_forward.1} parent=15 // pred_check_branch
          %328 = sbr.rel (%p326) target = $region40
        $region39: #{mlp_forward.1} parent=15 // pred_region
          %s329 = sand.u32 %s19, 1
          %s330 = scalar_lea.sflag [#allocation5], %s329
          %s331 = sand.u32 %s173, 1
          %s332 = smul.addr %s331, 512
          %s333 = scalar_lea.vmem [#allocation6], %s332
          %s335 = ssub.s32 8192, 8192
          %336 = vsyncadd %s330, %s335
          %s337 = smul.addr %s26, 128
          %s338 = smul.addr %s337, 64
          %s339 = scalar_lea.hbm %s5, %s338
          %s340 = sshll.u32 %s333, 4
          %s341 = int_to_ptr.vmem [resolvable:$true] %s340
          %346 = dma.hbm_to_vmem [thread:$0]  %s339, 8192, %s341, %s330, 512, 512, 32
        $region40: #{mlp_forward.1} parent=15 // pred_fallthru
          _
        // Predicated region
        $region41: #{mlp_forward.1} parent=15 // pred_check
          %p347 = pneg %p209
        $region42: #{mlp_forward.1} parent=15 // pred_check_branch
          %349 = sbr.rel (%p347) target = $region44
        $region43: #{mlp_forward.1} parent=15 // pred_region
          %p350 = scmp.lt.s32.totalorder %s26, 1
          %s351 = scalar_select %p350, %s26, 1
          %s352 = smul.addr %s351, 8
          %s353 = scalar_lea.vmem %s6, %s352
        $region44: #{mlp_forward.1} parent=15 // pred_fallthru
          _
      $region16: #{mlp_forward.1} parent=5 // pred_fallthru
        _
      %p354 = scmp.le.s32.totalorder 1, %s19
      %p355 = scmp.lt.s32.totalorder %s19, 3
      %p356 = pnand %p354, %p355
      %p357 = pneg %p356
      // Predicated region
      $region45: #{mlp_forward.1} parent=5 // pred_check
        _
      $region46: #{mlp_forward.1} parent=5 // pred_check_branch
        %359 = sbr.rel (%p356) target = $region48
      $region47: #{mlp_forward.1} parent=5 // pred_region
        %s360 = ssub.s32 %s19, 1
        %s361 = sand.u32 %s72, 1
        %s362 = scalar_lea.sflag [#allocation3], %s361
        %s363 = sand.u32 %s72, 1
        %s364 = smul.addr %s363, 64
        %s365 = scalar_lea.vmem [#allocation2], %s364
        // Predicated region
        $region49: #{mlp_forward.1} parent=47 // pred_check
          %p366 = pneg %p85
        $region50: #{mlp_forward.1} parent=47 // pred_check_branch
          %368 = sbr.rel (%p366) target = $region52
        $region51: #{mlp_forward.1} parent=47 // pred_region
          %369 = dma.done %s362, 1024
        $region52: #{mlp_forward.1} parent=47 // pred_fallthru
          _
        %s370 = sand.u32 %s24, 1
        %s371 = scalar_lea.sflag [#allocation5], %s370
        %s372 = sand.u32 %s124, 1
        %s373 = smul.addr %s372, 64
        %s374 = scalar_lea.vmem [#allocation4], %s373
        // Predicated region
        $region53: #{mlp_forward.1} parent=47 // pred_check
          %p375 = pneg %p137
        $region54: #{mlp_forward.1} parent=47 // pred_check_branch
          %377 = sbr.rel (%p375) target = $region56
        $region55: #{mlp_forward.1} parent=47 // pred_region
          %378 = dma.done %s371, 1024
        $region56: #{mlp_forward.1} parent=47 // pred_fallthru
          _
        %s379 = sand.u32 %s24, 1
        %s380 = scalar_lea.sflag [#allocation5], %s379
        %s381 = sand.u32 %s176, 1
        %s382 = smul.addr %s381, 512
        %s383 = scalar_lea.vmem [#allocation6], %s382
        // Predicated region
        $region57: #{mlp_forward.1} parent=47 // pred_check
          %p384 = pneg %p189
        $region58: #{mlp_forward.1} parent=47 // pred_check_branch
          %386 = sbr.rel (%p384) target = $region60
        $region59: #{mlp_forward.1} parent=47 // pred_region
          %387 = dma.done %s380, 8192
        $region60: #{mlp_forward.1} parent=47 // pred_fallthru
          _
        %p388 = scmp.lt.s32.totalorder %s28, 1
        %s389 = scalar_select %p388, %s28, 1
        %p390 = scmp.lt.s32.totalorder %s29, 0
        %s391 = scalar_select %p390, %s29, 0
        %s392 = sadd.s32 %s391, %s389
        %s393 = smul.addr %s392, 8
        %s394 = scalar_lea.vmem %s0, %s393
        %p395 = pneg %p59
        %p396 = pneg %p56
        %s397 = sand.u32 %s72, 1
        %s398 = scalar_lea.sflag [#allocation3], %s397
        %s399 = sand.u32 %s72, 1
        %s400 = smul.addr %s399, 64
        %s401 = scalar_lea.vmem [#allocation2], %s400
        %p402 = pneg %p85
        %p403 = pneg %p82
        %p404 = scmp.lt.s32.totalorder %s28, 1
        %s405 = scalar_select %p404, %s28, 1
        %s406 = scalar_lea.vmem %s2, %s405
        %p407 = pneg %p111
        %p408 = pneg %p108
        %s409 = sand.u32 %s24, 1
        %s410 = scalar_lea.sflag [#allocation5], %s409
        %s411 = sand.u32 %s124, 1
        %s412 = smul.addr %s411, 64
        %s413 = scalar_lea.vmem [#allocation4], %s412
        %p414 = pneg %p137
        %p415 = pneg %p134
        %p416 = scmp.lt.s32.totalorder %s28, 1
        %s417 = scalar_select %p416, %s28, 1
        %s418 = scalar_lea.vmem %s4, %s417
        %p419 = pneg %p163
        %p420 = pneg %p160
        %s421 = sand.u32 %s24, 1
        %s422 = scalar_lea.sflag [#allocation5], %s421
        %s423 = sand.u32 %s176, 1
        %s424 = smul.addr %s423, 512
        %s425 = scalar_lea.vmem [#allocation6], %s424
        %p426 = pneg %p189
        %p427 = pneg %p186
        %p428 = scmp.lt.s32.totalorder %s28, 1
        %s429 = scalar_select %p428, %s28, 1
        %s430 = smul.addr %s429, 8
        %s431 = scalar_lea.vmem %s6, %s430
        %p432 = pneg %p215
        %p433 = pneg %p212
        %p434 = pneg %p243
        %p435 = pneg %p240
        %p436 = scmp.lt.s32.totalorder %s28, 1
        %s437 = scalar_select %p436, %s28, 1
        %p438 = scmp.lt.s32.totalorder %s29, 0
        %s439 = scalar_select %p438, %s29, 0
        %s440 = smul.addr %s439, 8
        %s441 = smul.addr %s437, 8
        %s442 = sadd.s32 %s440, %s441
        %s443 = smul.addr %s442, 8
        %s444 = scalar_lea.vmem %s7, %s443
        %p445 = scmp.lt.s32.totalorder %s28, 1
        %s446 = scalar_select %p445, %s28, 1
        %p447 = scmp.lt.s32.totalorder %s29, 0
        %s448 = scalar_select %p447, %s29, 0
        %s449 = sadd.s32 %s448, %s446
        %s450 = smul.addr %s449, 8
        %s451 = scalar_lea.vmem %s0, %s450
        %p452 = scmp.lt.s32.totalorder %s28, 1
        %s453 = scalar_select %p452, %s28, 1
        %s454 = scalar_lea.vmem %s2, %s453
        %p455 = scmp.lt.s32.totalorder %s28, 1
        %s456 = scalar_select %p455, %s28, 1
        %s457 = scalar_lea.vmem %s4, %s456
        %p458 = scmp.lt.s32.totalorder %s28, 1
        %s459 = scalar_select %p458, %s28, 1
        %s460 = smul.addr %s459, 8
        %s461 = scalar_lea.vmem %s6, %s460
        %p462 = scmp.lt.s32.totalorder %s28, 1
        %s463 = scalar_select %p462, %s28, 1
        %p464 = scmp.lt.s32.totalorder %s29, 0
        %s465 = scalar_select %p464, %s29, 0
        %s466 = smul.addr %s465, 8
        %s467 = smul.addr %s463, 8
        %s468 = sadd.s32 %s466, %s467
        %s469 = smul.addr %s468, 8
        %s470 = scalar_lea.vmem %s7, %s469
        %v472 = vld [vmem:[%s451] sm:$0xff]
        %v473 = vpack.c.bf16 %v472, %v472
        %v474 = vld [vmem:[%s365] sm:$0xf]
        %v475 = vld [vmem:[%s365 + $0x4] sm:$0xf]
        %v476 = vld [vmem:[%s365 + $0x8] sm:$0xf]
        %v477 = vld [vmem:[%s365 + $0xc] sm:$0xf]
        %v478 = vld [vmem:[%s365 + $0x10] sm:$0xf]
        %v479 = vld [vmem:[%s365 + $0x14] sm:$0xf]
        %v480 = vld [vmem:[%s365 + $0x18] sm:$0xf]
        %v481 = vld [vmem:[%s365 + $0x1c] sm:$0xf]
        %v482 = vld [vmem:[%s365 + $0x20] sm:$0xf]
        %v483 = vld [vmem:[%s365 + $0x24] sm:$0xf]
        %v484 = vld [vmem:[%s365 + $0x28] sm:$0xf]
        %v485 = vld [vmem:[%s365 + $0x2c] sm:$0xf]
        %v486 = vld [vmem:[%s365 + $0x30] sm:$0xf]
        %v487 = vld [vmem:[%s365 + $0x34] sm:$0xf]
        %v488 = vld [vmem:[%s365 + $0x38] sm:$0xf]
        %v489 = vld [vmem:[%s365 + $0x3c] sm:$0xf]
        %v490 = vld [vmem:[%s454] sm:$0x1]
        %v492 = vlaneseq
        %v493 = vshrl.u32 %v492, 7
        %v494 = vsub.s32 0, %v493
        %v495 = vrot.slane %v490, %v494
        %v513 = vunpack.c.l.b16 %v474
        %v514 = vunpack.c.l.b16 %v475
        %v515 = vunpack.c.l.b16 %v476
        %v516 = vunpack.c.l.b16 %v477
        %v517 = vunpack.c.l.b16 %v478
        %v518 = vunpack.c.l.b16 %v479
        %v519 = vunpack.c.l.b16 %v480
        %v520 = vunpack.c.l.b16 %v481
        %v521 = vunpack.c.l.b16 %v482
        %v522 = vunpack.c.l.b16 %v483
        %v523 = vunpack.c.l.b16 %v484
        %v524 = vunpack.c.l.b16 %v485
        %v525 = vunpack.c.l.b16 %v486
        %v526 = vunpack.c.l.b16 %v487
        %v527 = vunpack.c.l.b16 %v488
        %v528 = vunpack.c.l.b16 %v489
        %v529 = vpack.c.b16 %v514, %v513
        %v530 = vpack.c.b16 %v516, %v515
        %v531 = vpack.c.b16 %v518, %v517
        %v532 = vpack.c.b16 %v520, %v519
        %v533 = vpack.c.b16 %v522, %v521
        %v534 = vpack.c.b16 %v524, %v523
        %v535 = vpack.c.b16 %v526, %v525
        %v536 = vpack.c.b16 %v528, %v527
        %545 = vmatprep.subr.bf16.mxu0 0
        %546 = vmatpush1.bf16.msra.mxu0 %v529
        %547 = vmatprep.subr.bf16.mxu0 0
        %548 = vmatpush1.bf16.msra.mxu0 %v530
        %549 = vmatprep.subr.bf16.mxu0 0
        %550 = vmatpush1.bf16.msra.mxu0 %v531
        %551 = vmatprep.subr.bf16.mxu0 0
        %552 = vmatpush1.bf16.msra.mxu0 %v532
        %553 = vmatprep.subr.bf16.mxu0 0
        %554 = vmatpush1.bf16.msra.mxu0 %v533
        %555 = vmatprep.subr.bf16.mxu0 0
        %556 = vmatpush1.bf16.msra.mxu0 %v534
        %557 = vmatprep.subr.bf16.mxu0 0
        %558 = vmatpush1.bf16.msra.mxu0 %v535
        %559 = vmatprep.subr.bf16.mxu0 0
        %560 = vmatpush1.bf16.msra.mxu0 %v536
        %561 = vmatprep.subr.bf16.mxu0 0
        %562 = vmatpush1.bf16.msra.mxu0 0
        %563 = vmatprep.subr.bf16.mxu0 0
        %564 = vmatpush1.bf16.msra.mxu0 0
        %565 = vmatprep.subr.bf16.mxu0 0
        %566 = vmatpush1.bf16.msra.mxu0 0
        %567 = vmatprep.subr.bf16.mxu0 0
        %568 = vmatpush1.bf16.msra.mxu0 0
        %569 = vmatprep.subr.bf16.mxu0 0
        %570 = vmatpush1.bf16.msra.mxu0 0
        %571 = vmatprep.subr.bf16.mxu0 0
        %572 = vmatpush1.bf16.msra.mxu0 0
        %573 = vmatprep.subr.bf16.mxu0 0
        %574 = vmatpush1.bf16.msra.mxu0 0
        %575 = vmatprep.subr.bf16.mxu0 0
        %576 = vmatpush1.bf16.msra.mxu0 0
        %577 = vmatprep.mubr.bf16.mxu0 0
        %578 = vmatmul.mubr.bf16.gmra.mrb[0].mxu0 %v473
        %v579 = vpop.f32.mrb[0].mxu0
        %v580 = vadd.f32 %v495, %v579
        %v581 = vpop.f32.mrb[0].mxu0
        %v582 = vpop.f32.mrb[0].mxu0
        %v583 = vpop.f32.mrb[0].mxu0
        %584 = vdwg.mxu0
        %v585 = vmax.f32 %v580, 0.0
        %v586 = vpack.c.bf16 %v585, %v585
        %v587 = vld [vmem:[%s374] sm:$0xf]
        %v588 = vld [vmem:[%s374 + $0x4] sm:$0xf]
        %v589 = vld [vmem:[%s374 + $0x8] sm:$0xf]
        %v590 = vld [vmem:[%s374 + $0xc] sm:$0xf]
        %v591 = vld [vmem:[%s374 + $0x10] sm:$0xf]
        %v592 = vld [vmem:[%s374 + $0x14] sm:$0xf]
        %v593 = vld [vmem:[%s374 + $0x18] sm:$0xf]
        %v594 = vld [vmem:[%s374 + $0x1c] sm:$0xf]
        %v595 = vld [vmem:[%s374 + $0x20] sm:$0xf]
        %v596 = vld [vmem:[%s374 + $0x24] sm:$0xf]
        %v597 = vld [vmem:[%s374 + $0x28] sm:$0xf]
        %v598 = vld [vmem:[%s374 + $0x2c] sm:$0xf]
        %v599 = vld [vmem:[%s374 + $0x30] sm:$0xf]
        %v600 = vld [vmem:[%s374 + $0x34] sm:$0xf]
        %v601 = vld [vmem:[%s374 + $0x38] sm:$0xf]
        %v602 = vld [vmem:[%s374 + $0x3c] sm:$0xf]
        %v603 = vld [vmem:[%s457] sm:$0x1]
        %v605 = vlaneseq
        %v606 = vshrl.u32 %v605, 7
        %v607 = vsub.s32 0, %v606
        %v608 = vrot.slane %v603, %v607
        %v626 = vunpack.c.l.b16 %v587
        %v627 = vunpack.c.l.b16 %v588
        %v628 = vunpack.c.l.b16 %v589
        %v629 = vunpack.c.l.b16 %v590
        %v630 = vunpack.c.l.b16 %v591
        %v631 = vunpack.c.l.b16 %v592
        %v632 = vunpack.c.l.b16 %v593
        %v633 = vunpack.c.l.b16 %v594
        %v634 = vunpack.c.l.b16 %v595
        %v635 = vunpack.c.l.b16 %v596
        %v636 = vunpack.c.l.b16 %v597
        %v637 = vunpack.c.l.b16 %v598
        %v638 = vunpack.c.l.b16 %v599
        %v639 = vunpack.c.l.b16 %v600
        %v640 = vunpack.c.l.b16 %v601
        %v641 = vunpack.c.l.b16 %v602
        %v642 = vpack.c.b16 %v627, %v626
        %v643 = vpack.c.b16 %v629, %v628
        %v644 = vpack.c.b16 %v631, %v630
        %v645 = vpack.c.b16 %v633, %v632
        %v646 = vpack.c.b16 %v635, %v634
        %v647 = vpack.c.b16 %v637, %v636
        %v648 = vpack.c.b16 %v639, %v638
        %v649 = vpack.c.b16 %v641, %v640
        %658 = vmatprep.subr.bf16.mxu0 0
        %659 = vmatpush1.bf16.msra.mxu0 %v642
        %660 = vmatprep.subr.bf16.mxu0 0
        %661 = vmatpush1.bf16.msra.mxu0 %v643
        %662 = vmatprep.subr.bf16.mxu0 0
        %663 = vmatpush1.bf16.msra.mxu0 %v644
        %664 = vmatprep.subr.bf16.mxu0 0
        %665 = vmatpush1.bf16.msra.mxu0 %v645
        %666 = vmatprep.subr.bf16.mxu0 0
        %667 = vmatpush1.bf16.msra.mxu0 %v646
        %668 = vmatprep.subr.bf16.mxu0 0
        %669 = vmatpush1.bf16.msra.mxu0 %v647
        %670 = vmatprep.subr.bf16.mxu0 0
        %671 = vmatpush1.bf16.msra.mxu0 %v648
        %672 = vmatprep.subr.bf16.mxu0 0
        %673 = vmatpush1.bf16.msra.mxu0 %v649
        %674 = vmatprep.subr.bf16.mxu0 0
        %675 = vmatpush1.bf16.msra.mxu0 0
        %676 = vmatprep.subr.bf16.mxu0 0
        %677 = vmatpush1.bf16.msra.mxu0 0
        %678 = vmatprep.subr.bf16.mxu0 0
        %679 = vmatpush1.bf16.msra.mxu0 0
        %680 = vmatprep.subr.bf16.mxu0 0
        %681 = vmatpush1.bf16.msra.mxu0 0
        %682 = vmatprep.subr.bf16.mxu0 0
        %683 = vmatpush1.bf16.msra.mxu0 0
        %684 = vmatprep.subr.bf16.mxu0 0
        %685 = vmatpush1.bf16.msra.mxu0 0
        %686 = vmatprep.subr.bf16.mxu0 0
        %687 = vmatpush1.bf16.msra.mxu0 0
        %688 = vmatprep.subr.bf16.mxu0 0
        %689 = vmatpush1.bf16.msra.mxu0 0
        %690 = vmatprep.mubr.bf16.mxu0 0
        %691 = vmatmul.mubr.bf16.gmra.mrb[0].mxu0 %v586
        %v692 = vpop.f32.mrb[0].mxu0
        %v693 = vadd.f32 %v608, %v692
        %v694 = vpop.f32.mrb[0].mxu0
        %v695 = vpop.f32.mrb[0].mxu0
        %v696 = vpop.f32.mrb[0].mxu0
        %697 = vdwg.mxu0
        %v698 = vmax.f32 %v693, 0.0
        %v699 = vpack.c.bf16 %v698, %v698
        %v700 = vld [vmem:[%s383] sm:$0xff]
        %v701 = vld [vmem:[%s383 + $0x8] sm:$0xff]
        %v702 = vld [vmem:[%s383 + $0x10] sm:$0xff]
        %v703 = vld [vmem:[%s383 + $0x18] sm:$0xff]
        %v704 = vld [vmem:[%s383 + $0x20] sm:$0xff]
        %v705 = vld [vmem:[%s383 + $0x28] sm:$0xff]
        %v706 = vld [vmem:[%s383 + $0x30] sm:$0xff]
        %v707 = vld [vmem:[%s383 + $0x38] sm:$0xff]
        %v708 = vld [vmem:[%s383 + $0x40] sm:$0xff]
        %v709 = vld [vmem:[%s383 + $0x48] sm:$0xff]
        %v710 = vld [vmem:[%s383 + $0x50] sm:$0xff]
        %v711 = vld [vmem:[%s383 + $0x58] sm:$0xff]
        %v712 = vld [vmem:[%s383 + $0x60] sm:$0xff]
        %v713 = vld [vmem:[%s383 + $0x68] sm:$0xff]
        %v714 = vld [vmem:[%s383 + $0x70] sm:$0xff]
        %v715 = vld [vmem:[%s383 + $0x78] sm:$0xff]
        %v716 = vld [vmem:[%s383 + $0x80] sm:$0xff]
        %v717 = vld [vmem:[%s383 + $0x88] sm:$0xff]
        %v718 = vld [vmem:[%s383 + $0x90] sm:$0xff]
        %v719 = vld [vmem:[%s383 + $0x98] sm:$0xff]
        %v720 = vld [vmem:[%s383 + $0xa0] sm:$0xff]
        %v721 = vld [vmem:[%s383 + $0xa8] sm:$0xff]
        %v722 = vld [vmem:[%s383 + $0xb0] sm:$0xff]
        %v723 = vld [vmem:[%s383 + $0xb8] sm:$0xff]
        %v724 = vld [vmem:[%s383 + $0xc0] sm:$0xff]
        %v725 = vld [vmem:[%s383 + $0xc8] sm:$0xff]
        %v726 = vld [vmem:[%s383 + $0xd0] sm:$0xff]
        %v727 = vld [vmem:[%s383 + $0xd8] sm:$0xff]
        %v728 = vld [vmem:[%s383 + $0xe0] sm:$0xff]
        %v729 = vld [vmem:[%s383 + $0xe8] sm:$0xff]
        %v730 = vld [vmem:[%s383 + $0xf0] sm:$0xff]
        %v731 = vld [vmem:[%s383 + $0xf8] sm:$0xff]
        %v732 = vld [vmem:[%s383 + $0x100] sm:$0xff]
        %v733 = vld [vmem:[%s383 + $0x108] sm:$0xff]
        %v734 = vld [vmem:[%s383 + $0x110] sm:$0xff]
        %v735 = vld [vmem:[%s383 + $0x118] sm:$0xff]
        %v736 = vld [vmem:[%s383 + $0x120] sm:$0xff]
        %v737 = vld [vmem:[%s383 + $0x128] sm:$0xff]
        %v738 = vld [vmem:[%s383 + $0x130] sm:$0xff]
        %v739 = vld [vmem:[%s383 + $0x138] sm:$0xff]
        %v740 = vld [vmem:[%s383 + $0x140] sm:$0xff]
        %v741 = vld [vmem:[%s383 + $0x148] sm:$0xff]
        %v742 = vld [vmem:[%s383 + $0x150] sm:$0xff]
        %v743 = vld [vmem:[%s383 + $0x158] sm:$0xff]
        %v744 = vld [vmem:[%s383 + $0x160] sm:$0xff]
        %v745 = vld [vmem:[%s383 + $0x168] sm:$0xff]
        %v746 = vld [vmem:[%s383 + $0x170] sm:$0xff]
        %v747 = vld [vmem:[%s383 + $0x178] sm:$0xff]
        %v748 = vld [vmem:[%s383 + $0x180] sm:$0xff]
        %v749 = vld [vmem:[%s383 + $0x188] sm:$0xff]
        %v750 = vld [vmem:[%s383 + $0x190] sm:$0xff]
        %v751 = vld [vmem:[%s383 + $0x198] sm:$0xff]
        %v752 = vld [vmem:[%s383 + $0x1a0] sm:$0xff]
        %v753 = vld [vmem:[%s383 + $0x1a8] sm:$0xff]
        %v754 = vld [vmem:[%s383 + $0x1b0] sm:$0xff]
        %v755 = vld [vmem:[%s383 + $0x1b8] sm:$0xff]
        %v756 = vld [vmem:[%s383 + $0x1c0] sm:$0xff]
        %v757 = vld [vmem:[%s383 + $0x1c8] sm:$0xff]
        %v758 = vld [vmem:[%s383 + $0x1d0] sm:$0xff]
        %v759 = vld [vmem:[%s383 + $0x1d8] sm:$0xff]
        %v760 = vld [vmem:[%s383 + $0x1e0] sm:$0xff]
        %v761 = vld [vmem:[%s383 + $0x1e8] sm:$0xff]
        %v762 = vld [vmem:[%s383 + $0x1f0] sm:$0xff]
        %v763 = vld [vmem:[%s383 + $0x1f8] sm:$0xff]
        %v764 = vld [vmem:[%s461] sm:$0xff]
        %v766 = vlaneseq
        %v767 = vshrl.u32 %v766, 7
        %v768 = vsub.s32 0, %v767
        %v769 = vrot.slane %v764, %v768
        %v770 = vlaneseq
        %v771 = vshrl.u32 %v770, 7
        %v772 = vsub.s32 1, %v771
        %v773 = vrot.slane %v764, %v772
        %v774 = vlaneseq
        %v775 = vshrl.u32 %v774, 7
        %v776 = vsub.s32 2, %v775
        %v777 = vrot.slane %v764, %v776
        %v778 = vlaneseq
        %v779 = vshrl.u32 %v778, 7
        %v780 = vsub.s32 3, %v779
        %v781 = vrot.slane %v764, %v780
        %v782 = vlaneseq
        %v783 = vshrl.u32 %v782, 7
        %v784 = vsub.s32 4, %v783
        %v785 = vrot.slane %v764, %v784
        %v786 = vlaneseq
        %v787 = vshrl.u32 %v786, 7
        %v788 = vsub.s32 5, %v787
        %v789 = vrot.slane %v764, %v788
        %v790 = vlaneseq
        %v791 = vshrl.u32 %v790, 7
        %v792 = vsub.s32 6, %v791
        %v793 = vrot.slane %v764, %v792
        %v794 = vlaneseq
        %v795 = vshrl.u32 %v794, 7
        %v796 = vsub.s32 7, %v795
        %v797 = vrot.slane %v764, %v796
        %v870 = vunpack.c.l.b16 %v700
        %v871 = vunpack.c.h.b16 %v700
        %v872 = vunpack.c.l.b16 %v701
        %v873 = vunpack.c.h.b16 %v701
        %v874 = vunpack.c.l.b16 %v702
        %v875 = vunpack.c.h.b16 %v702
        %v876 = vunpack.c.l.b16 %v703
        %v877 = vunpack.c.h.b16 %v703
        %v878 = vunpack.c.l.b16 %v704
        %v879 = vunpack.c.h.b16 %v704
        %v880 = vunpack.c.l.b16 %v705
        %v881 = vunpack.c.h.b16 %v705
        %v882 = vunpack.c.l.b16 %v706
        %v883 = vunpack.c.h.b16 %v706
        %v884 = vunpack.c.l.b16 %v707
        %v885 = vunpack.c.h.b16 %v707
        %v886 = vunpack.c.l.b16 %v708
        %v887 = vunpack.c.h.b16 %v708
        %v888 = vunpack.c.l.b16 %v709
        %v889 = vunpack.c.h.b16 %v709
        %v890 = vunpack.c.l.b16 %v710
        %v891 = vunpack.c.h.b16 %v710
        %v892 = vunpack.c.l.b16 %v711
        %v893 = vunpack.c.h.b16 %v711
        %v894 = vunpack.c.l.b16 %v712
        %v895 = vunpack.c.h.b16 %v712
        %v896 = vunpack.c.l.b16 %v713
        %v897 = vunpack.c.h.b16 %v713
        %v898 = vunpack.c.l.b16 %v714
        %v899 = vunpack.c.h.b16 %v714
        %v900 = vunpack.c.l.b16 %v715
        %v901 = vunpack.c.h.b16 %v715
        %v902 = vunpack.c.l.b16 %v716
        %v903 = vunpack.c.h.b16 %v716
        %v904 = vunpack.c.l.b16 %v717
        %v905 = vunpack.c.h.b16 %v717
        %v906 = vunpack.c.l.b16 %v718
        %v907 = vunpack.c.h.b16 %v718
        %v908 = vunpack.c.l.b16 %v719
        %v909 = vunpack.c.h.b16 %v719
        %v910 = vunpack.c.l.b16 %v720
        %v911 = vunpack.c.h.b16 %v720
        %v912 = vunpack.c.l.b16 %v721
        %v913 = vunpack.c.h.b16 %v721
        %v914 = vunpack.c.l.b16 %v722
        %v915 = vunpack.c.h.b16 %v722
        %v916 = vunpack.c.l.b16 %v723
        %v917 = vunpack.c.h.b16 %v723
        %v918 = vunpack.c.l.b16 %v724
        %v919 = vunpack.c.h.b16 %v724
        %v920 = vunpack.c.l.b16 %v725
        %v921 = vunpack.c.h.b16 %v725
        %v922 = vunpack.c.l.b16 %v726
        %v923 = vunpack.c.h.b16 %v726
        %v924 = vunpack.c.l.b16 %v727
        %v925 = vunpack.c.h.b16 %v727
        %v926 = vunpack.c.l.b16 %v728
        %v927 = vunpack.c.h.b16 %v728
        %v928 = vunpack.c.l.b16 %v729
        %v929 = vunpack.c.h.b16 %v729
        %v930 = vunpack.c.l.b16 %v730
        %v931 = vunpack.c.h.b16 %v730
        %v932 = vunpack.c.l.b16 %v731
        %v933 = vunpack.c.h.b16 %v731
        %v934 = vunpack.c.l.b16 %v732
        %v935 = vunpack.c.h.b16 %v732
        %v936 = vunpack.c.l.b16 %v733
        %v937 = vunpack.c.h.b16 %v733
        %v938 = vunpack.c.l.b16 %v734
        %v939 = vunpack.c.h.b16 %v734
        %v940 = vunpack.c.l.b16 %v735
        %v941 = vunpack.c.h.b16 %v735
        %v942 = vunpack.c.l.b16 %v736
        %v943 = vunpack.c.h.b16 %v736
        %v944 = vunpack.c.l.b16 %v737
        %v945 = vunpack.c.h.b16 %v737
        %v946 = vunpack.c.l.b16 %v738
        %v947 = vunpack.c.h.b16 %v738
        %v948 = vunpack.c.l.b16 %v739
        %v949 = vunpack.c.h.b16 %v739
        %v950 = vunpack.c.l.b16 %v740
        %v951 = vunpack.c.h.b16 %v740
        %v952 = vunpack.c.l.b16 %v741
        %v953 = vunpack.c.h.b16 %v741
        %v954 = vunpack.c.l.b16 %v742
        %v955 = vunpack.c.h.b16 %v742
        %v956 = vunpack.c.l.b16 %v743
        %v957 = vunpack.c.h.b16 %v743
        %v958 = vunpack.c.l.b16 %v744
        %v959 = vunpack.c.h.b16 %v744
        %v960 = vunpack.c.l.b16 %v745
        %v961 = vunpack.c.h.b16 %v745
        %v962 = vunpack.c.l.b16 %v746
        %v963 = vunpack.c.h.b16 %v746
        %v964 = vunpack.c.l.b16 %v747
        %v965 = vunpack.c.h.b16 %v747
        %v966 = vunpack.c.l.b16 %v748
        %v967 = vunpack.c.h.b16 %v748
        %v968 = vunpack.c.l.b16 %v749
        %v969 = vunpack.c.h.b16 %v749
        %v970 = vunpack.c.l.b16 %v750
        %v971 = vunpack.c.h.b16 %v750
        %v972 = vunpack.c.l.b16 %v751
        %v973 = vunpack.c.h.b16 %v751
        %v974 = vunpack.c.l.b16 %v752
        %v975 = vunpack.c.h.b16 %v752
        %v976 = vunpack.c.l.b16 %v753
        %v977 = vunpack.c.h.b16 %v753
        %v978 = vunpack.c.l.b16 %v754
        %v979 = vunpack.c.h.b16 %v754
        %v980 = vunpack.c.l.b16 %v755
        %v981 = vunpack.c.h.b16 %v755
        %v982 = vunpack.c.l.b16 %v756
        %v983 = vunpack.c.h.b16 %v756
        %v984 = vunpack.c.l.b16 %v757
        %v985 = vunpack.c.h.b16 %v757
        %v986 = vunpack.c.l.b16 %v758
        %v987 = vunpack.c.h.b16 %v758
        %v988 = vunpack.c.l.b16 %v759
        %v989 = vunpack.c.h.b16 %v759
        %v990 = vunpack.c.l.b16 %v760
        %v991 = vunpack.c.h.b16 %v760
        %v992 = vunpack.c.l.b16 %v761
        %v993 = vunpack.c.h.b16 %v761
        %v994 = vunpack.c.l.b16 %v762
        %v995 = vunpack.c.h.b16 %v762
        %v996 = vunpack.c.l.b16 %v763
        %v997 = vunpack.c.h.b16 %v763
        %v998 = vpack.c.b16 %v878, %v870
        %v999 = vpack.c.b16 %v879, %v871
        %v1000 = vpack.c.b16 %v880, %v872
        %v1001 = vpack.c.b16 %v881, %v873
        %v1002 = vpack.c.b16 %v882, %v874
        %v1003 = vpack.c.b16 %v883, %v875
        %v1004 = vpack.c.b16 %v884, %v876
        %v1005 = vpack.c.b16 %v885, %v877
        %v1006 = vpack.c.b16 %v894, %v886
        %v1007 = vpack.c.b16 %v895, %v887
        %v1008 = vpack.c.b16 %v896, %v888
        %v1009 = vpack.c.b16 %v897, %v889
        %v1010 = vpack.c.b16 %v898, %v890
        %v1011 = vpack.c.b16 %v899, %v891
        %v1012 = vpack.c.b16 %v900, %v892
        %v1013 = vpack.c.b16 %v901, %v893
        %v1014 = vpack.c.b16 %v910, %v902
        %v1015 = vpack.c.b16 %v911, %v903
        %v1016 = vpack.c.b16 %v912, %v904
        %v1017 = vpack.c.b16 %v913, %v905
        %v1018 = vpack.c.b16 %v914, %v906
        %v1019 = vpack.c.b16 %v915, %v907
        %v1020 = vpack.c.b16 %v916, %v908
        %v1021 = vpack.c.b16 %v917, %v909
        %v1022 = vpack.c.b16 %v926, %v918
        %v1023 = vpack.c.b16 %v927, %v919
        %v1024 = vpack.c.b16 %v928, %v920
        %v1025 = vpack.c.b16 %v929, %v921
        %v1026 = vpack.c.b16 %v930, %v922
        %v1027 = vpack.c.b16 %v931, %v923
        %v1028 = vpack.c.b16 %v932, %v924
        %v1029 = vpack.c.b16 %v933, %v925
        %v1030 = vpack.c.b16 %v942, %v934
        %v1031 = vpack.c.b16 %v943, %v935
        %v1032 = vpack.c.b16 %v944, %v936
        %v1033 = vpack.c.b16 %v945, %v937
        %v1034 = vpack.c.b16 %v946, %v938
        %v1035 = vpack.c.b16 %v947, %v939
        %v1036 = vpack.c.b16 %v948, %v940
        %v1037 = vpack.c.b16 %v949, %v941
        %v1038 = vpack.c.b16 %v958, %v950
        %v1039 = vpack.c.b16 %v959, %v951
        %v1040 = vpack.c.b16 %v960, %v952
        %v1041 = vpack.c.b16 %v961, %v953
        %v1042 = vpack.c.b16 %v962, %v954
        %v1043 = vpack.c.b16 %v963, %v955
        %v1044 = vpack.c.b16 %v964, %v956
        %v1045 = vpack.c.b16 %v965, %v957
        %v1046 = vpack.c.b16 %v974, %v966
        %v1047 = vpack.c.b16 %v975, %v967
        %v1048 = vpack.c.b16 %v976, %v968
        %v1049 = vpack.c.b16 %v977, %v969
        %v1050 = vpack.c.b16 %v978, %v970
        %v1051 = vpack.c.b16 %v979, %v971
        %v1052 = vpack.c.b16 %v980, %v972
        %v1053 = vpack.c.b16 %v981, %v973
        %v1054 = vpack.c.b16 %v990, %v982
        %v1055 = vpack.c.b16 %v991, %v983
        %v1056 = vpack.c.b16 %v992, %v984
        %v1057 = vpack.c.b16 %v993, %v985
        %v1058 = vpack.c.b16 %v994, %v986
        %v1059 = vpack.c.b16 %v995, %v987
        %v1060 = vpack.c.b16 %v996, %v988
        %v1061 = vpack.c.b16 %v997, %v989
        %1126 = vmatprep.subr.bf16.mxu0 %v999
        %1127 = vmatpush1.bf16.msra.mxu0 %v998
        %1128 = vmatprep.subr.bf16.mxu0 %v1007
        %1129 = vmatpush1.bf16.msra.mxu0 %v1006
        %1130 = vmatprep.subr.bf16.mxu0 %v1015
        %1131 = vmatpush1.bf16.msra.mxu0 %v1014
        %1132 = vmatprep.subr.bf16.mxu0 %v1023
        %1133 = vmatpush1.bf16.msra.mxu0 %v1022
        %1134 = vmatprep.subr.bf16.mxu0 %v1031
        %1135 = vmatpush1.bf16.msra.mxu0 %v1030
        %1136 = vmatprep.subr.bf16.mxu0 %v1039
        %1137 = vmatpush1.bf16.msra.mxu0 %v1038
        %1138 = vmatprep.subr.bf16.mxu0 %v1047
        %1139 = vmatpush1.bf16.msra.mxu0 %v1046
        %1140 = vmatprep.subr.bf16.mxu0 %v1055
        %1141 = vmatpush1.bf16.msra.mxu0 %v1054
        %1142 = vmatprep.subr.bf16.mxu0 0
        %1143 = vmatpush1.bf16.msra.mxu0 0
        %1144 = vmatprep.subr.bf16.mxu0 0
        %1145 = vmatpush1.bf16.msra.mxu0 0
        %1146 = vmatprep.subr.bf16.mxu0 0
        %1147 = vmatpush1.bf16.msra.mxu0 0
        %1148 = vmatprep.subr.bf16.mxu0 0
        %1149 = vmatpush1.bf16.msra.mxu0 0
        %1150 = vmatprep.subr.bf16.mxu0 0
        %1151 = vmatpush1.bf16.msra.mxu0 0
        %1152 = vmatprep.subr.bf16.mxu0 0
        %1153 = vmatpush1.bf16.msra.mxu0 0
        %1154 = vmatprep.subr.bf16.mxu0 0
        %1155 = vmatpush1.bf16.msra.mxu0 0
        %1156 = vmatprep.subr.bf16.mxu0 0
        %1157 = vmatpush1.bf16.msra.mxu0 0
        %1158 = vmatprep.mubr.bf16.mxu0 0
        %1159 = vmatmul.mubr.bf16.gmra.mrb[0].mxu0 %v699
        %v1160 = vpop.f32.mrb[0].mxu0
        %v1161 = vadd.f32 %v769, %v1160
        %v1162 = vpop.f32.mrb[0].mxu0
        %v1163 = vadd.f32 %v773, %v1162
        %v1164 = vpop.f32.mrb[0].mxu0
        %v1165 = vpop.f32.mrb[0].mxu0
        %1166 = vdwg.mxu0
        %1167 = vmatprep.subr.bf16.mxu0 %v1001
        %1168 = vmatpush1.bf16.msra.mxu0 %v1000
        %1169 = vmatprep.subr.bf16.mxu0 %v1009
        %1170 = vmatpush1.bf16.msra.mxu0 %v1008
        %1171 = vmatprep.subr.bf16.mxu0 %v1017
        %1172 = vmatpush1.bf16.msra.mxu0 %v1016
        %1173 = vmatprep.subr.bf16.mxu0 %v1025
        %1174 = vmatpush1.bf16.msra.mxu0 %v1024
        %1175 = vmatprep.subr.bf16.mxu0 %v1033
        %1176 = vmatpush1.bf16.msra.mxu0 %v1032
        %1177 = vmatprep.subr.bf16.mxu0 %v1041
        %1178 = vmatpush1.bf16.msra.mxu0 %v1040
        %1179 = vmatprep.subr.bf16.mxu0 %v1049
        %1180 = vmatpush1.bf16.msra.mxu0 %v1048
        %1181 = vmatprep.subr.bf16.mxu0 %v1057
        %1182 = vmatpush1.bf16.msra.mxu0 %v1056
        %1183 = vmatprep.subr.bf16.mxu0 0
        %1184 = vmatpush1.bf16.msra.mxu0 0
        %1185 = vmatprep.subr.bf16.mxu0 0
        %1186 = vmatpush1.bf16.msra.mxu0 0
        %1187 = vmatprep.subr.bf16.mxu0 0
        %1188 = vmatpush1.bf16.msra.mxu0 0
        %1189 = vmatprep.subr.bf16.mxu0 0
        %1190 = vmatpush1.bf16.msra.mxu0 0
        %1191 = vmatprep.subr.bf16.mxu0 0
        %1192 = vmatpush1.bf16.msra.mxu0 0
        %1193 = vmatprep.subr.bf16.mxu0 0
        %1194 = vmatpush1.bf16.msra.mxu0 0
        %1195 = vmatprep.subr.bf16.mxu0 0
        %1196 = vmatpush1.bf16.msra.mxu0 0
        %1197 = vmatprep.subr.bf16.mxu0 0
        %1198 = vmatpush1.bf16.msra.mxu0 0
        %1199 = vmatprep.mubr.bf16.mxu0 0
        %1200 = vmatmul.mubr.bf16.gmra.mrb[0].mxu0 %v699
        %v1201 = vpop.f32.mrb[0].mxu0
        %v1202 = vadd.f32 %v777, %v1201
        %v1203 = vpop.f32.mrb[0].mxu0
        %v1204 = vadd.f32 %v781, %v1203
        %v1205 = vpop.f32.mrb[0].mxu0
        %v1206 = vpop.f32.mrb[0].mxu0
        %1207 = vdwg.mxu0
        %1208 = vmatprep.subr.bf16.mxu0 %v1003
        %1209 = vmatpush1.bf16.msra.mxu0 %v1002
        %1210 = vmatprep.subr.bf16.mxu0 %v1011
        %1211 = vmatpush1.bf16.msra.mxu0 %v1010
        %1212 = vmatprep.subr.bf16.mxu0 %v1019
        %1213 = vmatpush1.bf16.msra.mxu0 %v1018
        %1214 = vmatprep.subr.bf16.mxu0 %v1027
        %1215 = vmatpush1.bf16.msra.mxu0 %v1026
        %1216 = vmatprep.subr.bf16.mxu0 %v1035
        %1217 = vmatpush1.bf16.msra.mxu0 %v1034
        %1218 = vmatprep.subr.bf16.mxu0 %v1043
        %1219 = vmatpush1.bf16.msra.mxu0 %v1042
        %1220 = vmatprep.subr.bf16.mxu0 %v1051
        %1221 = vmatpush1.bf16.msra.mxu0 %v1050
        %1222 = vmatprep.subr.bf16.mxu0 %v1059
        %1223 = vmatpush1.bf16.msra.mxu0 %v1058
        %1224 = vmatprep.subr.bf16.mxu0 0
        %1225 = vmatpush1.bf16.msra.mxu0 0
        %1226 = vmatprep.subr.bf16.mxu0 0
        %1227 = vmatpush1.bf16.msra.mxu0 0
        %1228 = vmatprep.subr.bf16.mxu0 0
        %1229 = vmatpush1.bf16.msra.mxu0 0
        %1230 = vmatprep.subr.bf16.mxu0 0
        %1231 = vmatpush1.bf16.msra.mxu0 0
        %1232 = vmatprep.subr.bf16.mxu0 0
        %1233 = vmatpush1.bf16.msra.mxu0 0
        %1234 = vmatprep.subr.bf16.mxu0 0
        %1235 = vmatpush1.bf16.msra.mxu0 0
        %1236 = vmatprep.subr.bf16.mxu0 0
        %1237 = vmatpush1.bf16.msra.mxu0 0
        %1238 = vmatprep.subr.bf16.mxu0 0
        %1239 = vmatpush1.bf16.msra.mxu0 0
        %1240 = vmatprep.mubr.bf16.mxu0 0
        %1241 = vmatmul.mubr.bf16.gmra.mrb[0].mxu0 %v699
        %v1242 = vpop.f32.mrb[0].mxu0
        %v1243 = vadd.f32 %v785, %v1242
        %v1244 = vpop.f32.mrb[0].mxu0
        %v1245 = vadd.f32 %v789, %v1244
        %v1246 = vpop.f32.mrb[0].mxu0
        %v1247 = vpop.f32.mrb[0].mxu0
        %1248 = vdwg.mxu0
        %1249 = vmatprep.subr.bf16.mxu0 %v1005
        %1250 = vmatpush1.bf16.msra.mxu0 %v1004
        %1251 = vmatprep.subr.bf16.mxu0 %v1013
        %1252 = vmatpush1.bf16.msra.mxu0 %v1012
        %1253 = vmatprep.subr.bf16.mxu0 %v1021
        %1254 = vmatpush1.bf16.msra.mxu0 %v1020
        %1255 = vmatprep.subr.bf16.mxu0 %v1029
        %1256 = vmatpush1.bf16.msra.mxu0 %v1028
        %1257 = vmatprep.subr.bf16.mxu0 %v1037
        %1258 = vmatpush1.bf16.msra.mxu0 %v1036
        %1259 = vmatprep.subr.bf16.mxu0 %v1045
        %1260 = vmatpush1.bf16.msra.mxu0 %v1044
        %1261 = vmatprep.subr.bf16.mxu0 %v1053
        %1262 = vmatpush1.bf16.msra.mxu0 %v1052
        %1263 = vmatprep.subr.bf16.mxu0 %v1061
        %1264 = vmatpush1.bf16.msra.mxu0 %v1060
        %1265 = vmatprep.subr.bf16.mxu0 0
        %1266 = vmatpush1.bf16.msra.mxu0 0
        %1267 = vmatprep.subr.bf16.mxu0 0
        %1268 = vmatpush1.bf16.msra.mxu0 0
        %1269 = vmatprep.subr.bf16.mxu0 0
        %1270 = vmatpush1.bf16.msra.mxu0 0
        %1271 = vmatprep.subr.bf16.mxu0 0
        %1272 = vmatpush1.bf16.msra.mxu0 0
        %1273 = vmatprep.subr.bf16.mxu0 0
        %1274 = vmatpush1.bf16.msra.mxu0 0
        %1275 = vmatprep.subr.bf16.mxu0 0
        %1276 = vmatpush1.bf16.msra.mxu0 0
        %1277 = vmatprep.subr.bf16.mxu0 0
        %1278 = vmatpush1.bf16.msra.mxu0 0
        %1279 = vmatprep.subr.bf16.mxu0 0
        %1280 = vmatpush1.bf16.msra.mxu0 0
        %1281 = vmatprep.mubr.bf16.mxu0 0
        %1282 = vmatmul.mubr.bf16.gmra.mrb[0].mxu0 %v699
        %v1283 = vpop.f32.mrb[0].mxu0
        %v1284 = vadd.f32 %v793, %v1283
        %v1285 = vpop.f32.mrb[0].mxu0
        %v1286 = vadd.f32 %v797, %v1285
        %v1287 = vpop.f32.mrb[0].mxu0
        %v1288 = vpop.f32.mrb[0].mxu0
        %1289 = vdwg.mxu0
        %1290 = vst [vmem:[%s470] sm:$0xff] %v1161
        %1291 = vst [vmem:[%s470 + $0x8] sm:$0xff] %v1163
        %1292 = vst [vmem:[%s470 + $0x10] sm:$0xff] %v1202
        %1293 = vst [vmem:[%s470 + $0x18] sm:$0xff] %v1204
        %1294 = vst [vmem:[%s470 + $0x20] sm:$0xff] %v1243
        %1295 = vst [vmem:[%s470 + $0x28] sm:$0xff] %v1245
        %1296 = vst [vmem:[%s470 + $0x30] sm:$0xff] %v1284
        %1297 = vst [vmem:[%s470 + $0x38] sm:$0xff] %v1286
        %p1298 = scmp.lt.s32.totalorder %s28, 1
        %s1299 = scalar_select %p1298, %s28, 1
        %p1300 = scmp.lt.s32.totalorder %s29, 0
        %s1301 = scalar_select %p1300, %s29, 0
        %s1302 = smul.addr %s1301, 8
        %s1303 = smul.addr %s1299, 8
        %s1304 = sadd.s32 %s1302, %s1303
        %s1305 = smul.addr %s1304, 8
        %s1306 = scalar_lea.vmem %s7, %s1305
        // Predicated region
        $region61: #{mlp_forward.1} parent=47 // pred_check
          %p1307 = pneg %p240
        $region62: #{mlp_forward.1} parent=47 // pred_check_branch
          %1309 = sbr.rel (%p1307) target = $region64
        $region63: #{mlp_forward.1} parent=47 // pred_region
          _
        $region64: #{mlp_forward.1} parent=47 // pred_fallthru
          _
      $region48: #{mlp_forward.1} parent=5 // pred_fallthru
        _
      %p1310 = scmp.le.s32.totalorder 2, %s19
      // Predicated region
      $region65: #{mlp_forward.1} parent=5 // pred_check
        %p1311 = pneg %p1310
      $region66: #{mlp_forward.1} parent=5 // pred_check_branch
        %1313 = sbr.rel (%p1311) target = $region68
      $region67: #{mlp_forward.1} parent=5 // pred_region
        %s1314 = ssub.s32 %s19, 2
        // Predicated region
        $region69: #{mlp_forward.1} parent=67 // pred_check
          %p1315 = pneg %p246
        $region70: #{mlp_forward.1} parent=67 // pred_check_branch
          %1317 = sbr.rel (%p1315) target = $region72
        $region71: #{mlp_forward.1} parent=67 // pred_region
          %p1318 = scmp.lt.s32.totalorder %s30, 1
          %s1319 = scalar_select %p1318, %s30, 1
          %p1320 = scmp.lt.s32.totalorder %s31, 0
          %s1321 = scalar_select %p1320, %s31, 0
          %s1322 = smul.addr %s1321, 8
          %s1323 = smul.addr %s1319, 8
          %s1324 = sadd.s32 %s1322, %s1323
          %s1325 = smul.addr %s1324, 8
          %s1326 = scalar_lea.vmem %s7, %s1325
        $region72: #{mlp_forward.1} parent=67 // pred_fallthru
          _
      $region68: #{mlp_forward.1} parent=5 // pred_fallthru
        _
    $region6: #{mlp_forward.1} parent=1 // loop_footer
      %s23 = sadd.s32 1, %s19
    $region7: #{mlp_forward.1} parent=1 // loop_footer_branch
      %18 = sbr.rel target = $region3
    $region8: #{mlp_forward.1} parent=1 // loop_exit
      _
    %1327 = vsyncpa [#allocation3], 1
    %s1328 = scalar_lea.sflag [#allocation3], 1
    %1329 = vsyncpa %s1328, 1
    %1330 = vsyncpa [#allocation5], 1
    %s1331 = scalar_lea.sflag [#allocation5], 1
    %1332 = vsyncpa %s1331, 1

</llo_original>
